<compile_context>
chip_gen: v7x
topology: tpu7x:2x2x1
jax: 0.10.0
libtpu: 0.0.40
codegen_flags: <defaults>
</compile_context>

<pallas_src>
import functools

import numpy as np
import jax
import jax.numpy as jnp
from jax.experimental import pallas as pl
from jax.experimental.pallas import tpu as pltpu

_VMEM_BUDGET = 26 << 20          # target working-set bytes (fits all chips)


def _cdiv(a, b):
    return (a + b - 1) // b


def _round_up(x, m):
    return ((x + m - 1) // m) * m


def _choose_batch_tile(B, tm_cap):
    """Balanced batch tile: multiple of 8 rows, >=2 tiles when B >= 16
    (so v7x's two TensorCores both get work); single full-B block otherwise."""
    if B < 16:
        return B                              # full-dim block, exempt from 8-row rule
    cap = max(8, (tm_cap // 8) * 8)
    n_tiles = max(2, _cdiv(B, cap))
    return _round_up(_cdiv(B, n_tiles), 8)


def _vmem_limit(needed_bytes):
    return int(min(max(needed_bytes + (8 << 20), 32 << 20), 48 << 20))


# ---------------------------------------------------------------------------
# Kernels
# ---------------------------------------------------------------------------
def _linear_kernel(x_ref, w_ref, b_ref, o_ref, *, compute_dtype):
    """Single-pass: o = x @ W + b.  x_ref (tm, C), w_ref (C, ncls_p) resident,
    b_ref (1, ncls_p) f32 resident, o_ref (tm, ncls_p)."""
    x = x_ref[...]
    if x.dtype != compute_dtype:
        x = x.astype(compute_dtype)
    acc = jnp.dot(x, w_ref[...], preferred_element_type=jnp.float32)
    o_ref[...] = (acc + b_ref[...]).astype(o_ref.dtype)


def _linear_acc_kernel(x_ref, w_ref, b_ref, o_ref, acc_ref, *, compute_dtype):
    """Fallback for very large C: reduction grid axis with f32 accumulator.
    Bias is folded into the k==0 accumulator init."""
    k = pl.program_id(1)

    @pl.when(k == 0)
    def _():
        acc_ref[...] = jnp.broadcast_to(b_ref[...], acc_ref.shape).astype(jnp.float32)

    x = x_ref[...]
    if x.dtype != compute_dtype:
        x = x.astype(compute_dtype)
    acc_ref[...] += jnp.dot(x, w_ref[...], preferred_element_type=jnp.float32)

    @pl.when(k == pl.num_programs(1) - 1)
    def _():
        o_ref[...] = acc_ref[...].astype(o_ref.dtype)


# ---------------------------------------------------------------------------
# Wrapper
# ---------------------------------------------------------------------------
def classifier_1fc(x, weight, bias, droprate=0.0,
                   compute_dtype=jnp.bfloat16, tm_max=512):
    """Forward pass of Classifier_1fc.

    x:      (B, C)            activations (bf16 inputs are the fast path)
    weight: (n_classes, C)    PyTorch nn.Linear layout
    bias:   (n_classes,)
    """
    # TODO(synk): training-mode dropout (droprate != 0.0) not implemented;
    # the module defaults to droprate=0.0 (identity), matching eval semantics.
    assert droprate == 0.0

    B, C = x.shape
    n_classes = weight.shape[0]
    assert weight.shape == (n_classes, C)
    assert bias.shape == (n_classes,)

    compute_dtype = np.dtype(compute_dtype)
    out_dtype = x.dtype
    xsz = np.dtype(x.dtype).itemsize
    csz = compute_dtype.itemsize
    osz = np.dtype(out_dtype).itemsize

    # Lane-dense output: pad classes up to a multiple of 128 (tiny copy).
    ncls_p = _round_up(n_classes, 128)

    # Pre-transposed, class-padded, compute-dtype weight (C, ncls_p) and f32
    # bias (1, ncls_p). Done once in the wrapper so the resident weight block
    # is never re-cast / re-transposed inside the kernel.
    w_t = jnp.pad(weight.astype(compute_dtype).T,
                  ((0, 0), (0, ncls_p - n_classes)))
    b2d = jnp.pad(bias.astype(jnp.float32),
                  (0, ncls_p - n_classes)).reshape(1, ncls_p)

    cast_x = np.dtype(x.dtype) != compute_dtype

    # ---- can the full-C tile (x block + resident weight) fit the budget? ----
    w_bytes = 2 * C * ncls_p * csz + 2 * ncls_p * 4          # weight + bias (x2, conservative)
    per_row = (2 * C * xsz                                   # x, double-buffered
               + (C * csz if cast_x else 0)                  # in-kernel cast temp
               + 2 * ncls_p * osz                            # out, double-buffered
               + ncls_p * 4)                                 # f32 matmul result temp
    avail = _VMEM_BUDGET - w_bytes
    tm_cap = 0 if avail <= 0 else min(tm_max, avail // per_row)

    if tm_cap >= min(B, 8):
        # ------------------ common single-pass path ------------------
        tm = _choose_batch_tile(B, tm_cap)
        grid = (_cdiv(B, tm),)                               # no x padding; edge tile masked
        needed = (2 * tm * C * xsz + (tm * C * csz if cast_x else 0)
                  + w_bytes + 2 * tm * ncls_p * osz + tm * ncls_p * 4)

        out_p = pl.pallas_call(
            functools.partial(_linear_kernel, compute_dtype=compute_dtype),
            out_shape=jax.ShapeDtypeStruct((B, ncls_p), out_dtype),
            grid_spec=pltpu.PrefetchScalarGridSpec(
                num_scalar_prefetch=0,
                grid=grid,
                in_specs=[
                    pl.BlockSpec((tm, C), lambda i: (i, 0)),          # x tile (full C)
                    pl.BlockSpec((C, ncls_p), lambda i: (0, 0)),      # weight, resident
                    pl.BlockSpec((1, ncls_p), lambda i: (0, 0)),      # bias, resident
                ],
                out_specs=pl.BlockSpec((tm, ncls_p), lambda i: (i, 0)),
            ),
            compiler_params=pltpu.CompilerParams(
                dimension_semantics=("parallel",),
                vmem_limit_bytes=_vmem_limit(needed)),
        )(x, w_t, b2d)
    else:
        # -------- fallback for very large C: stream K, f32 accumulator --------
        tk = 2048 if csz <= 2 else 1024
        c_pad = _round_up(C, tk)
        # Padding x along C is required here so OOB columns cannot corrupt the
        # reduction; this path only triggers for C far beyond classifier sizes.
        x_in = jnp.pad(x, ((0, 0), (0, c_pad - C))) if c_pad != C else x
        w_in = jnp.pad(w_t, ((0, c_pad - C), (0, 0))) if c_pad != C else w_t
        tm = _choose_batch_tile(B, 256)
        grid = (_cdiv(B, tm), c_pad // tk)
        needed = (2 * tm * tk * xsz + (tm * tk * csz if cast_x else 0)
                  + 2 * tk * ncls_p * csz + tm * ncls_p * 4
                  + 2 * tm * ncls_p * osz + 2 * ncls_p * 4)

        out_p = pl.pallas_call(
            functools.partial(_linear_acc_kernel, compute_dtype=compute_dtype),
            out_shape=jax.ShapeDtypeStruct((B, ncls_p), out_dtype),
            grid_spec=pltpu.PrefetchScalarGridSpec(
                num_scalar_prefetch=0,
                grid=grid,
                in_specs=[
                    pl.BlockSpec((tm, tk), lambda i, k: (i, k)),      # x tile
                    pl.BlockSpec((tk, ncls_p), lambda i, k: (k, 0)),  # weight slab
                    pl.BlockSpec((1, ncls_p), lambda i, k: (0, 0)),   # bias, resident
                ],
                out_specs=pl.BlockSpec((tm, ncls_p), lambda i, k: (i, 0)),
                scratch_shapes=[pltpu.VMEM((tm, ncls_p), jnp.float32)],
            ),
            compiler_params=pltpu.CompilerParams(
                dimension_semantics=("parallel", "arbitrary"),
                vmem_limit_bytes=_vmem_limit(needed)),
        )(x_in, w_in, b2d)

    return out_p[:, :n_classes]


# ---------------------------------------------------------------------------
# Self-test
# ---------------------------------------------------------------------------
if __name__ == "__main__":
    key = jax.random.PRNGKey(0)

    def make_inputs(k, B, C, NCLS):
        k_x, k_w, k_b = jax.random.split(k, 3)
        bound = 1.0 / (C ** 0.5)
        x = jax.random.normal(k_x, (B, C), dtype=jnp.float32)
        w = jax.random.uniform(k_w, (NCLS, C), jnp.float32, -bound, bound)
        b = jax.random.uniform(k_b, (NCLS,), jnp.float32, -bound, bound)
        return x, w, b

    def ref_fp64(x, w, b):
        return (np.asarray(x, np.float64) @ np.asarray(w, np.float64).T
                + np.asarray(b, np.float64))

    k1, k2 = jax.random.split(key)

    # Case 1: toy shapes matching the module defaults (B=8, C=32, NCLS=4).
    x, w, b = make_inputs(k1, B=8, C=32, NCLS=4)
    ref = ref_fp64(x, w, b)

    out_f32 = classifier_1fc(x, w, b, droprate=0.0, compute_dtype=jnp.float32)
    jax.block_until_ready(out_f32)
    assert out_f32.shape == (8, 4)
    assert jnp.allclose(out_f32, ref, atol=2e-3, rtol=2e-3)

    out_bf16 = classifier_1fc(x, w, b, droprate=0.0, compute_dtype=jnp.bfloat16)
    jax.block_until_ready(out_bf16)
    assert jnp.allclose(out_bf16, ref, atol=3e-2, rtol=3e-2)

    # Case 2: exercises balanced batch tiling (2 tiles, masked partial edge
    # tile, no wrapper-side padding of x) and class-lane padding
    # (B=300 -> tm=152, C=1100 full-C block, NCLS=10 -> 128 lanes).
    x2, w2, b2 = make_inputs(k2, B=300, C=1100, NCLS=10)
    ref2 = ref_fp64(x2, w2, b2)

    out2_f32 = classifier_1fc(x2, w2, b2, droprate=0.0, compute_dtype=jnp.float32)
    jax.block_until_ready(out2_f32)
    assert out2_f32.shape == (300, 10)
    assert jnp.allclose(out2_f32, ref2, atol=2e-3, rtol=2e-3)

    out2_bf16 = classifier_1fc(x2, w2, b2, droprate=0.0, compute_dtype=jnp.bfloat16)
    jax.block_until_ready(out2_bf16)
    assert jnp.allclose(out2_bf16, ref2, atol=3e-2, rtol=3e-2)

    print("KERNEL_OK")
</pallas_src>

<mosaic_0001>
module attributes {stable_mosaic.version = 11 : i64} {
  func.func @_linear_kernel(%arg0: i32, %arg1: memref<8x32xf32, #tpu.memory_space<vmem>>, %arg2: memref<32x128xf32, #tpu.memory_space<vmem>>, %arg3: memref<1x128xf32, #tpu.memory_space<vmem>>, %arg4: memref<8x128xf32, #tpu.memory_space<vmem>>) attributes {dimension_semantics = [#tpu.dimension_semantics<parallel>], iteration_bounds = array<i64: 1>, scalar_prefetch = 0 : i64, scratch_operands = 0 : i64, tpu.core_type = #tpu.core_type<tc>, window_params = [{transform_indices = @transform_0, window_bounds = array<i64: 8, 32>}, {pipeline_mode = #tpu.pipeline_mode<synchronous>, transform_indices = @transform_1, window_bounds = array<i64: 32, 128>}, {pipeline_mode = #tpu.pipeline_mode<synchronous>, transform_indices = @transform_2, window_bounds = array<i64: 1, 128>}, {transform_indices = @transform_3, window_bounds = array<i64: 8, 128>}]} {
    %c0 = arith.constant 0 : index
    %c0_0 = arith.constant 0 : index
    %0 = vector.load %arg1[%c0, %c0_0] : memref<8x32xf32, #tpu.memory_space<vmem>>, vector<8x32xf32>
    %c0_1 = arith.constant 0 : index
    %c0_2 = arith.constant 0 : index
    %1 = vector.load %arg2[%c0_1, %c0_2] : memref<32x128xf32, #tpu.memory_space<vmem>>, vector<32x128xf32>
    %cst = arith.constant dense<0.000000e+00> : vector<8x128xf32>
    %2 = tpu.matmul %0, %1, %cst {dimension_numbers = #tpu.dot_dimension_numbers<[1], [0], [0], [1], [0, 0, 1, 1], [], []>} : vector<8x32xf32>, vector<32x128xf32>, vector<8x128xf32> -> vector<8x128xf32>
    %c0_3 = arith.constant 0 : index
    %c0_4 = arith.constant 0 : index
    %3 = vector.load %arg3[%c0_3, %c0_4] : memref<1x128xf32, #tpu.memory_space<vmem>>, vector<1x128xf32>
    %4 = vector.broadcast %3 : vector<1x128xf32> to vector<8x128xf32>
    %5 = arith.addf %2, %4 : vector<8x128xf32>
    %c0_5 = arith.constant 0 : index
    %c0_6 = arith.constant 0 : index
    %6 = vector.load %arg4[%c0_5, %c0_6] : memref<8x128xf32, #tpu.memory_space<vmem>>, vector<8x128xf32>
    tpu.vector_store %arg4[%c0_5, %c0_6], %5 {strides = array<i32>} : memref<8x128xf32, #tpu.memory_space<vmem>>, vector<8x128xf32>,
    return
  }
  func.func @transform_0(%arg0: i32) -> (i32, i32) {
    %c0_i32 = arith.constant 0 : i32
    %c0_i32_0 = arith.constant 0 : i32
    return %arg0, %c0_i32 : i32, i32
  }
  func.func @transform_1(%arg0: i32) -> (i32, i32) {
    %c0_i32 = arith.constant 0 : i32
    %c0_i32_0 = arith.constant 0 : i32
    %c0_i32_1 = arith.constant 0 : i32
    return %c0_i32, %c0_i32_0 : i32, i32
  }
  func.func @transform_2(%arg0: i32) -> (i32, i32) {
    %c0_i32 = arith.constant 0 : i32
    %c0_i32_0 = arith.constant 0 : i32
    %c0_i32_1 = arith.constant 0 : i32
    return %c0_i32, %c0_i32_0 : i32, i32
  }
  func.func @transform_3(%arg0: i32) -> (i32, i32) {
    %c0_i32 = arith.constant 0 : i32
    %c0_i32_0 = arith.constant 0 : i32
    return %arg0, %c0_i32 : i32, i32
  }
}

</mosaic_0001>

<llo_original>
// kernel: tpu_custom_call.1
$region0: #{tpu_custom_call.1}
  #allocation0 [shape = 'u32[]', space=smem, size = 0x4, offset = 0x4, fixed_abs, tag = 'smem constant byte address 0x4 - core index']
  #allocation1 [shape = 'u32[144,128]{1,0:T(1,128)}', space=vmem, size = 0x12000, scoped, tag = 'internal scratch']
  %s0 = inlined_call_operand.hbm [shape: f32[8,32], index: 0, kind: input, shape index: {}]
  %s1 = inlined_call_operand.hbm [shape: f32[32,128], index: 1, kind: input, shape index: {}]
  %s2 = inlined_call_operand.vmem [shape: f32[1,128], index: 2, kind: input, shape index: {}]
  %s3 = inlined_call_operand.hbm [shape: f32[8,128], index: 3, kind: output, shape index: {}]
  %s4 = sld [smem:[#allocation0]]
  $region30: #{tpu_custom_call.1} parent=0
    _
  %s6 = ssub.s32 1, %s4
  %s7 = scalar_select 0, %s6, %s4
  $region1: #{tpu_custom_call.1} parent=0
    #allocation2 [shape = 'u8[4096]{0}', space=vmem, size = 0x1000, scoped, tag = 'input window, operand 0, single buffered']
    #allocation3 [shape = 's32[1]{0}', space=sflag, size = 0x4, scoped, tag = 'scoped memory for tpu_custom_call.1']
    #allocation4 [shape = 's32[1]{0}', space=sflag, size = 0x4, scoped, tag = 'scoped memory for tpu_custom_call.1']
    #allocation5 [shape = 'u8[16384]{0}', space=vmem, size = 0x4000, scoped, tag = 'input window, operand 1, single buffered']
    #allocation6 [shape = 's32[1]{0}', space=sflag, size = 0x4, scoped, tag = 'scoped memory for tpu_custom_call.1']
    #allocation7 [shape = 'u8[4096]{0}', space=vmem, size = 0x1000, scoped, tag = 'output window, operand 0, single buffered']
    %8 = vsyncpa [#allocation3], 0
    %9 = vsyncpa [#allocation6], 0
    %10 = vsyncpa [#allocation4], 0
    // Predicated region
    $region2: #{tpu_custom_call.1} parent=1 // pred_check
      _
    $region3: #{tpu_custom_call.1} parent=1 // pred_check_branch
      %12 = sbr.rel (0) target = $region5
    $region4: #{tpu_custom_call.1} parent=1 // pred_region
      %s14 = ssub.s32 128, 128
      %15 = vsyncadd [#allocation3], %s14
      %s17 = sshll.u32 [#allocation2], 4
      %s18 = int_to_ptr.vmem [resolvable:$true] %s17
      %20 = dma.hbm_to_vmem [thread:$0]  %s0, 128, %s18, [#allocation3]
    $region5: #{tpu_custom_call.1} parent=1 // pred_fallthru
      _
    // Predicated region
    $region6: #{tpu_custom_call.1} parent=1 // pred_check
      _
    $region7: #{tpu_custom_call.1} parent=1 // pred_check_branch
      %22 = sbr.rel (0) target = $region9
    $region8: #{tpu_custom_call.1} parent=1 // pred_region
      %s24 = ssub.s32 512, 512
      %25 = vsyncadd [#allocation6], %s24
      %s26 = sshll.u32 [#allocation5], 4
      %s27 = int_to_ptr.vmem [resolvable:$true] %s26
      %32 = dma.hbm_to_vmem [thread:$0]  %s1, 512, %s27, [#allocation6], 128, 128, 8
    $region9: #{tpu_custom_call.1} parent=1 // pred_fallthru
      _
    // Predicated region
    $region10: #{tpu_custom_call.1} parent=1 // pred_check
      _
    $region11: #{tpu_custom_call.1} parent=1 // pred_check_branch
      %34 = sbr.rel (0) target = $region13
    $region12: #{tpu_custom_call.1} parent=1 // pred_region
      _
    $region13: #{tpu_custom_call.1} parent=1 // pred_fallthru
      _
    // Predicated region
    $region14: #{tpu_custom_call.1} parent=1 // pred_check
      _
    $region15: #{tpu_custom_call.1} parent=1 // pred_check_branch
      %36 = sbr.rel (0) target = $region17
    $region16: #{tpu_custom_call.1} parent=1 // pred_region
      %37 = dma.done [#allocation3], 128
    $region17: #{tpu_custom_call.1} parent=1 // pred_fallthru
      _
    // Predicated region
    $region18: #{tpu_custom_call.1} parent=1 // pred_check
      _
    $region19: #{tpu_custom_call.1} parent=1 // pred_check_branch
      %39 = sbr.rel (0) target = $region21
    $region20: #{tpu_custom_call.1} parent=1 // pred_region
      %40 = dma.done [#allocation6], 512
    $region21: #{tpu_custom_call.1} parent=1 // pred_fallthru
      _
    %v41 = vld [vmem:[#allocation2] sm:$0xff]
    %v42 = vld [vmem:[#allocation5] sm:$0xff]
    %v43 = vld [vmem:[#allocation5 + $0x8] sm:$0xff]
    %v44 = vld [vmem:[#allocation5 + $0x10] sm:$0xff]
    %v45 = vld [vmem:[#allocation5 + $0x18] sm:$0xff]
    %v46 = vld [vmem:[%s2] sm:$0x1]
    %v48 = vlaneseq
    %v49 = vshrl.u32 %v48, 7
    %v50 = vsub.s32 0, %v49
    %v51 = vrot.slane %v46, %v50
    %vm53 = vcmask 261120
    %v55 = vsel %vm53, %v41, 0
    %57 = vmatprep.subr.mxu0 0.0
    %58 = vmatpush1.msra.mxu0 %v42
    %59 = vmatprep.subr.mxu0 0.0
    %60 = vmatpush1.msra.mxu0 %v43
    %61 = vmatprep.subr.mxu0 0.0
    %62 = vmatpush1.msra.mxu0 %v44
    %63 = vmatprep.subr.mxu0 0.0
    %64 = vmatpush1.msra.mxu0 %v45
    %65 = vmatprep.subr.mxu0 0.0
    %66 = vmatpush1.msra.mxu0 0.0
    %67 = vmatprep.subr.mxu0 0.0
    %68 = vmatpush1.msra.mxu0 0.0
    %69 = vmatprep.subr.mxu0 0.0
    %70 = vmatpush1.msra.mxu0 0.0
    %71 = vmatprep.subr.mxu0 0.0
    %72 = vmatpush1.msra.mxu0 0.0
    %73 = vmatprep.subr.mxu0 0.0
    %74 = vmatpush1.msra.mxu0 0.0
    %75 = vmatprep.subr.mxu0 0.0
    %76 = vmatpush1.msra.mxu0 0.0
    %77 = vmatprep.subr.mxu0 0.0
    %78 = vmatpush1.msra.mxu0 0.0
    %79 = vmatprep.subr.mxu0 0.0
    %80 = vmatpush1.msra.mxu0 0.0
    %81 = vmatprep.subr.mxu0 0.0
    %82 = vmatpush1.msra.mxu0 0.0
    %83 = vmatprep.subr.mxu0 0.0
    %84 = vmatpush1.msra.mxu0 0.0
    %85 = vmatprep.subr.mxu0 0.0
    %86 = vmatpush1.msra.mxu0 0.0
    %87 = vmatprep.subr.mxu0 0.0
    %88 = vmatpush1.msra.mxu0 0.0
    %89 = vmatprep.subr.mxu0 0.0
    %90 = vmatpush1.msra.mxu0 0.0
    %91 = vmatprep.subr.mxu0 0.0
    %92 = vmatpush1.msra.mxu0 0.0
    %93 = vmatprep.subr.mxu0 0.0
    %94 = vmatpush1.msra.mxu0 0.0
    %95 = vmatprep.subr.mxu0 0.0
    %96 = vmatpush1.msra.mxu0 0.0
    %97 = vmatprep.subr.mxu0 0.0
    %98 = vmatpush1.msra.mxu0 0.0
    %99 = vmatprep.subr.mxu0 0.0
    %100 = vmatpush1.msra.mxu0 0.0
    %101 = vmatprep.subr.mxu0 0.0
    %102 = vmatpush1.msra.mxu0 0.0
    %103 = vmatprep.subr.mxu0 0.0
    %104 = vmatpush1.msra.mxu0 0.0
    %105 = vmatprep.subr.mxu0 0.0
    %106 = vmatpush1.msra.mxu0 0.0
    %107 = vmatprep.subr.mxu0 0.0
    %108 = vmatpush1.msra.mxu0 0.0
    %109 = vmatprep.subr.mxu0 0.0
    %110 = vmatpush1.msra.mxu0 0.0
    %111 = vmatprep.subr.mxu0 0.0
    %112 = vmatpush1.msra.mxu0 0.0
    %113 = vmatprep.subr.mxu0 0.0
    %114 = vmatpush1.msra.mxu0 0.0
    %115 = vmatprep.subr.mxu0 0.0
    %116 = vmatpush1.msra.mxu0 0.0
    %117 = vmatprep.subr.mxu0 0.0
    %118 = vmatpush1.msra.mxu0 0.0
    %119 = vmatprep.subr.mxu0 0.0
    %120 = vmatpush1.msra.mxu0 0.0
    %121 = vmatprep.mubr.f32.mxu0 0.0
    %122 = vmatmul.mubr.f32.gmra.mrb[0].mxu0 %v55
    %v123 = vpop.f32.mrb[0].mxu0
    %v124 = vadd.f32 %v51, %v123
    %v125 = vpop.f32.mrb[0].mxu0
    %126 = vdwg.mxu0
    %127 = vst [vmem:[#allocation7] sm:$0xff] %v124
    // Predicated region
    $region22: #{tpu_custom_call.1} parent=1 // pred_check
      _
    $region23: #{tpu_custom_call.1} parent=1 // pred_check_branch
      %129 = sbr.rel (0) target = $region25
    $region24: #{tpu_custom_call.1} parent=1 // pred_region
      %s131 = ssub.s32 128, 128
      %132 = vsyncadd [#allocation4], %s131
      %s134 = sshll.u32 [#allocation7], 4
      %s135 = int_to_ptr.vmem [resolvable:$true] %s134
      %137 = dma.vmem_to_hbm [thread:$0]  %s135, 128, %s3, [#allocation4]
    $region25: #{tpu_custom_call.1} parent=1 // pred_fallthru
      _
    // Predicated region
    $region26: #{tpu_custom_call.1} parent=1 // pred_check
      _
    $region27: #{tpu_custom_call.1} parent=1 // pred_check_branch
      %139 = sbr.rel (0) target = $region29
    $region28: #{tpu_custom_call.1} parent=1 // pred_region
      %140 = dma.done [#allocation4], 128
    $region29: #{tpu_custom_call.1} parent=1 // pred_fallthru
      _
    %141 = vsyncpa [#allocation3], 1
    %142 = vsyncpa [#allocation6], 1
    %143 = vsyncpa [#allocation4], 1

</llo_original>
